<compile_context>
chip_gen: v7x
topology: tpu7x:2x2x1
jax: 0.10.0
libtpu: 0.0.40
codegen_flags: <defaults>
</compile_context>

<pallas_src>
import jax
import jax.numpy as jnp
from jax.experimental import pallas as pl
from jax.experimental.pallas import tpu as pltpu


def _wadj_msg_agg_kernel(adj_ref, msg_ref, out_ref, w_ref):
    # adj_ref: (1, TI, N), msg_ref: (1, TI, N, TF), out_ref: (1, TI, TF)
    # w_ref:   (1, TI, N) f32 scratch -- softmax weights cached across f-tiles.

    # Softmax over the source-node (j) axis, computed once per (b, i) tile.
    @pl.when(pl.program_id(2) == 0)
    def _():
        adj = adj_ref[...].astype(jnp.float32)                 # (1, TI, N)
        a_max = jnp.max(adj, axis=-1, keepdims=True)
        e = jnp.exp(adj - a_max)
        denom = jnp.sum(e, axis=-1, keepdims=True)
        inv = pl.reciprocal(denom, approx=True)                # EUP vrcp
        inv = inv * (2.0 - denom * inv)                        # Newton step -> ~f32
        w_ref[...] = e * inv

    msg = msg_ref[...].astype(jnp.float32)                     # (1, TI, N, TF)
    w = w_ref[...]                                             # (1, TI, N)
    out = jnp.sum(msg * w[..., None], axis=-2)                 # reduce over j
    out_ref[...] = out.astype(out_ref.dtype)


def wadj_msg_agg(messages: jax.Array, adj: jax.Array,
                 tile_i: int | None = None, tile_f: int | None = None) -> jax.Array:
    """messages: (B, N, N, F), adj: (B, N, N) -> (B, N, F)."""
    B, N, N2, F = messages.shape
    assert N == N2 and adj.shape == (B, N, N)

    msg_itemsize = jnp.dtype(messages.dtype).itemsize
    adj_itemsize = jnp.dtype(adj.dtype).itemsize

    # ---- tile selection -----------------------------------------------------
    # TILE_F: full F (always legal) or a multiple of 128 for lane-dense stores.
    if tile_f is None:
        tile_f = F if F <= 512 else 512
    # TILE_I: full N or a multiple of 8; shrink so one message tile stays
    # <= ~16 MiB (x2 double buffer ~= 32 MiB, safe on v7x's 64 MiB VMEM).
    if tile_i is None:
        budget = 16 << 20
        tile_i = min(N, 256)
        while tile_i > 8 and tile_i * N * tile_f * msg_itemsize > budget:
            tile_i = max(8, (tile_i // 2) & ~7)

    grid = (B, pl.cdiv(N, tile_i), pl.cdiv(F, tile_f))

    # ---- VMEM budget hint ---------------------------------------------------
    msg_bytes = tile_i * N * tile_f * msg_itemsize
    adj_bytes = tile_i * N * adj_itemsize
    out_bytes = tile_i * tile_f * msg_itemsize
    w_bytes = tile_i * N * 4
    est = 2 * (msg_bytes + adj_bytes + out_bytes) + w_bytes
    vmem_limit = min(max(int(1.5 * est) + (2 << 20), 32 << 20), 64 << 20)

    return pl.pallas_call(
        _wadj_msg_agg_kernel,
        out_shape=jax.ShapeDtypeStruct((B, N, F), messages.dtype),
        grid_spec=pltpu.PrefetchScalarGridSpec(
            num_scalar_prefetch=0,
            grid=grid,
            in_specs=[
                # adj: full j axis per block (softmax axis must stay whole).
                pl.BlockSpec((1, tile_i, N), lambda b, i, f: (b, i, 0)),
                # messages: tiled over dst-node i and feature f, full j axis.
                pl.BlockSpec((1, tile_i, N, tile_f), lambda b, i, f: (b, i, 0, f)),
            ],
            out_specs=pl.BlockSpec((1, tile_i, tile_f), lambda b, i, f: (b, i, f)),
            scratch_shapes=[pltpu.VMEM((1, tile_i, N), jnp.float32)],
        ),
        compiler_params=pltpu.CompilerParams(
            # b, i are independent (megacore-shardable); f must stay sequential
            # per (b, i) so the cached softmax weights are valid.
            dimension_semantics=("parallel", "parallel", "arbitrary"),
            vmem_limit_bytes=vmem_limit,
        ),
    )(adj, messages)


def _reference(messages, adj):
    w = jax.nn.softmax(adj, axis=-1)[..., None]
    return jnp.sum(messages * w, axis=-2)


if __name__ == "__main__":
    key = jax.random.PRNGKey(0)
    k_msg, k_adj, k_msg2, k_adj2 = jax.random.split(key, 4)

    # Small shape matching the module conventions (single f/i block).
    B, N, F = 2, 8, 32
    messages = jax.random.normal(k_msg, (B, N, N, F), dtype=jnp.float32)
    adj = jax.random.normal(k_adj, (B, N, N), dtype=jnp.float32)

    out = jax.block_until_ready(wadj_msg_agg(messages, adj))
    ref = _reference(messages, adj)
    assert out.shape == (B, N, F)
    assert jnp.allclose(out, ref, atol=1e-4, rtol=1e-4)

    # Second check exercising the tiled path (multiple i and f tiles, so the
    # cached-softmax-weights scheme is actually used across f iterations).
    B2, N2_, F2 = 1, 16, 256
    messages2 = jax.random.normal(k_msg2, (B2, N2_, N2_, F2), dtype=jnp.float32)
    adj2 = jax.random.normal(k_adj2, (B2, N2_, N2_), dtype=jnp.float32)

    out2 = jax.block_until_ready(wadj_msg_agg(messages2, adj2, tile_i=8, tile_f=128))
    ref2 = _reference(messages2, adj2)
    assert out2.shape == (B2, N2_, F2)
    assert jnp.allclose(out2, ref2, atol=1e-4, rtol=1e-4)

    print("KERNEL_OK")
</pallas_src>

<mosaic_0001>
module attributes {stable_mosaic.version = 11 : i64} {
  func.func @_wadj_msg_agg_kernel(%arg0: i32, %arg1: i32, %arg2: i32, %arg3: memref<1x8x8xf32, #tpu.memory_space<vmem>>, %arg4: memref<1x8x8x32xf32, #tpu.memory_space<vmem>>, %arg5: memref<1x8x32xf32, #tpu.memory_space<vmem>>, %arg6: memref<1x8x8xf32, #tpu.memory_space<vmem>>) attributes {dimension_semantics = [#tpu.dimension_semantics<parallel>, #tpu.dimension_semantics<parallel>, #tpu.dimension_semantics<arbitrary>], iteration_bounds = array<i64: 2, 1, 1>, scalar_prefetch = 0 : i64, scratch_operands = 1 : i64, tpu.core_type = #tpu.core_type<tc>, window_params = [{transform_indices = @transform_0, window_bounds = array<i64: 1, 8, 8>}, {transform_indices = @transform_1, window_bounds = array<i64: 1, 8, 8, 32>}, {transform_indices = @transform_2, window_bounds = array<i64: 1, 8, 32>}]} {
    %c0_i32 = arith.constant 0 : i32
    %0 = arith.cmpi eq, %arg2, %c0_i32 : i32
    %1 = arith.extui %0 : i1 to i32
    %c0_i32_0 = arith.constant 0 : i32
    %2 = arith.cmpi ne, %1, %c0_i32_0 : i32
    scf.if %2 {
      %c0_10 = arith.constant 0 : index
      %c0_11 = arith.constant 0 : index
      %c0_12 = arith.constant 0 : index
      %10 = vector.load %arg3[%c0_10, %c0_11, %c0_12] : memref<1x8x8xf32, #tpu.memory_space<vmem>>, vector<1x8x8xf32>
      %cst_13 = arith.constant dense<0xFF800000> : vector<1x8xf32>
      %11 = vector.multi_reduction <maximumf>, %10, %cst_13 [2] : vector<1x8x8xf32> to vector<1x8xf32>
      %12 = vector.shape_cast %11 : vector<1x8xf32> to vector<1x8x1xf32>
      %13 = vector.broadcast %12 : vector<1x8x1xf32> to vector<1x8x8xf32>
      %14 = arith.subf %10, %13 : vector<1x8x8xf32>
      %15 = math.exp %14 : vector<1x8x8xf32>
      %cst_14 = arith.constant dense<0.000000e+00> : vector<1x8xf32>
      %16 = vector.multi_reduction <add>, %15, %cst_14 [2] : vector<1x8x8xf32> to vector<1x8xf32>
      %17 = vector.shape_cast %16 : vector<1x8xf32> to vector<1x8x1xf32>
      %18 = tpu.reciprocal %17 {approx = true} : vector<1x8x1xf32> -> vector<1x8x1xf32>
      %19 = arith.mulf %17, %18 : vector<1x8x1xf32>
      %cst_15 = arith.constant 2.000000e+00 : f32
      %20 = vector.broadcast %cst_15 : f32 to vector<1x8x1xf32>
      %21 = arith.subf %20, %19 : vector<1x8x1xf32>
      %22 = arith.mulf %18, %21 : vector<1x8x1xf32>
      %23 = vector.broadcast %22 : vector<1x8x1xf32> to vector<1x8x8xf32>
      %24 = arith.mulf %15, %23 : vector<1x8x8xf32>
      %c0_16 = arith.constant 0 : index
      %c0_17 = arith.constant 0 : index
      %c0_18 = arith.constant 0 : index
      %25 = vector.load %arg6[%c0_16, %c0_17, %c0_18] : memref<1x8x8xf32, #tpu.memory_space<vmem>>, vector<1x8x8xf32>
      tpu.vector_store %arg6[%c0_16, %c0_17, %c0_18], %24 {strides = array<i32>} : memref<1x8x8xf32, #tpu.memory_space<vmem>>, vector<1x8x8xf32>,
    } else {
    }
    %c0 = arith.constant 0 : index
    %c0_1 = arith.constant 0 : index
    %c0_2 = arith.constant 0 : index
    %c0_3 = arith.constant 0 : index
    %3 = vector.load %arg4[%c0, %c0_1, %c0_2, %c0_3] : memref<1x8x8x32xf32, #tpu.memory_space<vmem>>, vector<1x8x8x32xf32>
    %c0_4 = arith.constant 0 : index
    %c0_5 = arith.constant 0 : index
    %c0_6 = arith.constant 0 : index
    %4 = vector.load %arg6[%c0_4, %c0_5, %c0_6] : memref<1x8x8xf32, #tpu.memory_space<vmem>>, vector<1x8x8xf32>
    %5 = vector.shape_cast %4 : vector<1x8x8xf32> to vector<1x8x8x1xf32>
    %6 = vector.broadcast %5 : vector<1x8x8x1xf32> to vector<1x8x8x32xf32>
    %7 = arith.mulf %3, %6 : vector<1x8x8x32xf32>
    %cst = arith.constant dense<0.000000e+00> : vector<1x8x32xf32>
    %8 = vector.multi_reduction <add>, %7, %cst [2] : vector<1x8x8x32xf32> to vector<1x8x32xf32>
    %c0_7 = arith.constant 0 : index
    %c0_8 = arith.constant 0 : index
    %c0_9 = arith.constant 0 : index
    %9 = vector.load %arg5[%c0_7, %c0_8, %c0_9] : memref<1x8x32xf32, #tpu.memory_space<vmem>>, vector<1x8x32xf32>
    tpu.vector_store %arg5[%c0_7, %c0_8, %c0_9], %8 {strides = array<i32>} : memref<1x8x32xf32, #tpu.memory_space<vmem>>, vector<1x8x32xf32>,
    return
  }
  func.func @transform_0(%arg0: i32, %arg1: i32, %arg2: i32) -> (i32, i32, i32) {
    %c0_i32 = arith.constant 0 : i32
    %c0_i32_0 = arith.constant 0 : i32
    return %arg0, %arg1, %c0_i32 : i32, i32, i32
  }
  func.func @transform_1(%arg0: i32, %arg1: i32, %arg2: i32) -> (i32, i32, i32, i32) {
    %c0_i32 = arith.constant 0 : i32
    %c0_i32_0 = arith.constant 0 : i32
    return %arg0, %arg1, %c0_i32, %arg2 : i32, i32, i32, i32
  }
  func.func @transform_2(%arg0: i32, %arg1: i32, %arg2: i32) -> (i32, i32, i32) {
    %c0_i32 = arith.constant 0 : i32
    return %arg0, %arg1, %arg2 : i32, i32, i32
  }
}

</mosaic_0001>

<llo_original>
// kernel: tpu_custom_call.1
$region0: #{tpu_custom_call.1}
  #allocation0 [shape = 'u32[]', space=smem, size = 0x4, offset = 0x4, fixed_abs, tag = 'smem constant byte address 0x4 - core index']
  #allocation1 [shape = 'u32[144,128]{1,0:T(1,128)}', space=vmem, size = 0x12000, scoped, tag = 'internal scratch']
  #allocation2 [shape = 'f32[1,8,8]{2,1,0:T(8,128)}', space=vmem, size = 0x1000, scoped, tag = 'scratch operand']
  %s0 = inlined_call_operand.hbm [shape: f32[2,8,8], index: 0, kind: input, shape index: {}]
  %s1 = inlined_call_operand.hbm [shape: f32[2,8,8,32], index: 1, kind: input, shape index: {}]
  %s2 = inlined_call_operand.hbm [shape: f32[2,8,32], index: 2, kind: output, shape index: {}]
  %s3 = sld [smem:[#allocation0]]
  $region53: #{tpu_custom_call.1} parent=0
    _
  %s5 = ssub.s32 1, %s3
  %s6 = scalar_select 0, %s5, %s3
  $region1: #{tpu_custom_call.1} parent=0
    #allocation3 [shape = 'u8[8192]{0}', space=vmem, size = 0x2000, scoped, tag = 'input window, operand 0']
    #allocation4 [shape = 's32[2]{0}', space=sflag, size = 0x8, scoped, tag = 'scoped memory for tpu_custom_call.1']
    #allocation5 [shape = 's32[2]{0}', space=sflag, size = 0x8, scoped, tag = 'scoped memory for tpu_custom_call.1']
    #allocation6 [shape = 'u8[65536]{0}', space=vmem, size = 0x10000, scoped, tag = 'input window, operand 1']
    #allocation7 [shape = 's32[2]{0}', space=sflag, size = 0x8, scoped, tag = 'scoped memory for tpu_custom_call.1']
    #allocation8 [shape = 'u8[8192]{0}', space=vmem, size = 0x2000, scoped, tag = 'output window, operand 0']
    %7 = vsyncpa [#allocation4], 0
    %s8 = scalar_lea.sflag [#allocation4], 1
    %9 = vsyncpa %s8, 0
    %10 = vsyncpa [#allocation7], 0
    %s11 = scalar_lea.sflag [#allocation7], 1
    %12 = vsyncpa %s11, 0
    %13 = vsyncpa [#allocation5], 0
    %s14 = scalar_lea.sflag [#allocation5], 1
    %15 = vsyncpa %s14, 0
    loop: start=0, step=1, limit=4
    $region2: #{tpu_custom_call.1} parent=1 // loop_pre_header
      _
    $region3: #{tpu_custom_call.1} parent=1 // loop_header
      %s17 = sphi 0, %s21
      %p18 = scmp.ge.s32.totalorder %s17, 4
      %s24 = sphi 0, %s43
      %s25 = sphi 0, %s39
      %s26 = sphi 0, %s35
      %s27 = sphi 0, %s24
      %s28 = sphi 0, %s25
      %s29 = sphi 0, %s26
      %s30 = sphi 0, %s27
      %s31 = sphi 0, %s28
      %s32 = sphi 0, %s29
      %s48 = sphi 0, %s50
      %s51 = sphi 0, %s48
      %s52 = sphi 0, %s51
      %s68 = sphi 0, %s52
      %s78 = sphi 0, %s80
      %s81 = sphi 0, %s78
      %s82 = sphi 0, %s81
      %s98 = sphi 0, %s82
      %s108 = sphi 0, %s110
      %s111 = sphi 0, %s108
      %s112 = sphi 0, %s111
      %s128 = sphi 0, %s112
    $region4: #{tpu_custom_call.1} parent=1 // loop_header_branch
      %20 = sbr.rel (%p18) target = $region8
    $region5: #{tpu_custom_call.1} parent=1 // loop_body
      %s22 = ssub.s32 %s17, 1
      %s23 = ssub.s32 %s17, 2
      %s33 = sadd.s32 1, %s26
      %p34 = scmp.ge.s32.totalorder %s33, 1
      %s35 = scalar_select %p34, 0, %s33
      %s36 = sadd.s32 1, %s25
      %s37 = scalar_select %p34, %s36, %s25
      %p38 = scmp.ge.s32.totalorder %s37, 1
      %s39 = scalar_select %p38, 0, %s37
      %s40 = sadd.s32 1, %s24
      %s41 = scalar_select %p38, %s40, %s24
      %p42 = scmp.ge.s32.totalorder %s41, 2
      %s43 = scalar_select %p42, 0, %s41
      %s44 = ssub.s32 %s24, %s43
      %s45 = ssub.s32 %s25, %s39
      %s46 = sor.u32 %s44, %s45
      %p47 = scmp.eq.s32.totalorder %s46, 0
      %s49 = sadd.s32 %s48, 1
      %s50 = scalar_select %p47, %s48, %s49
      %p53 = pneg %p47
      %p54 = scmp.eq.s32.totalorder %s17, 1
      %p55 = por %p53, %p54
      %p56 = scmp.ne.s32.totalorder %s48, %s51
      %p57 = scmp.eq.s32.totalorder %s17, 0
      %p58 = por %p56, %p57
      %p59 = scmp.ne.s32.totalorder %s48, %s51
      %p60 = scmp.eq.s32.totalorder %s22, 1
      %p61 = por %p59, %p60
      %p62 = scmp.ne.s32.totalorder %s51, %s52
      %p63 = scmp.eq.s32.totalorder %s22, 0
      %p64 = por %p62, %p63
      %p65 = scmp.ne.s32.totalorder %s51, %s52
      %p66 = scmp.eq.s32.totalorder %s23, 1
      %p67 = por %p65, %p66
      %p69 = scmp.ne.s32.totalorder %s52, %s68
      %p70 = scmp.eq.s32.totalorder %s23, 0
      %p71 = por %p69, %p70
      %s72 = ssub.s32 %s24, %s43
      %s73 = ssub.s32 %s25, %s39
      %s74 = sor.u32 %s72, %s73
      %s75 = ssub.s32 %s26, %s35
      %s76 = sor.u32 %s74, %s75
      %p77 = scmp.eq.s32.totalorder %s76, 0
      %s79 = sadd.s32 %s78, 1
      %s80 = scalar_select %p77, %s78, %s79
      %p83 = pneg %p77
      %p84 = scmp.eq.s32.totalorder %s17, 1
      %p85 = por %p83, %p84
      %p86 = scmp.ne.s32.totalorder %s78, %s81
      %p87 = scmp.eq.s32.totalorder %s17, 0
      %p88 = por %p86, %p87
      %p89 = scmp.ne.s32.totalorder %s78, %s81
      %p90 = scmp.eq.s32.totalorder %s22, 1
      %p91 = por %p89, %p90
      %p92 = scmp.ne.s32.totalorder %s81, %s82
      %p93 = scmp.eq.s32.totalorder %s22, 0
      %p94 = por %p92, %p93
      %p95 = scmp.ne.s32.totalorder %s81, %s82
      %p96 = scmp.eq.s32.totalorder %s23, 1
      %p97 = por %p95, %p96
      %p99 = scmp.ne.s32.totalorder %s82, %s98
      %p100 = scmp.eq.s32.totalorder %s23, 0
      %p101 = por %p99, %p100
      %s102 = ssub.s32 %s24, %s43
      %s103 = ssub.s32 %s25, %s39
      %s104 = sor.u32 %s102, %s103
      %s105 = ssub.s32 %s26, %s35
      %s106 = sor.u32 %s104, %s105
      %p107 = scmp.eq.s32.totalorder %s106, 0
      %s109 = sadd.s32 %s108, 1
      %s110 = scalar_select %p107, %s108, %s109
      %p113 = pneg %p107
      %p114 = scmp.eq.s32.totalorder %s17, 1
      %p115 = por %p113, %p114
      %p116 = scmp.ne.s32.totalorder %s108, %s111
      %p117 = scmp.eq.s32.totalorder %s17, 0
      %p118 = por %p116, %p117
      %p119 = scmp.ne.s32.totalorder %s108, %s111
      %p120 = scmp.eq.s32.totalorder %s22, 1
      %p121 = por %p119, %p120
      %p122 = scmp.ne.s32.totalorder %s111, %s112
      %p123 = scmp.eq.s32.totalorder %s22, 0
      %p124 = por %p122, %p123
      %p125 = scmp.ne.s32.totalorder %s111, %s112
      %p126 = scmp.eq.s32.totalorder %s23, 1
      %p127 = por %p125, %p126
      %p129 = scmp.ne.s32.totalorder %s112, %s128
      %p130 = scmp.eq.s32.totalorder %s23, 0
      %p131 = por %p129, %p130
      %p132 = scmp.le.s32.totalorder 1, %s17
      %p133 = scmp.lt.s32.totalorder %s17, 3
      %p134 = pnand %p132, %p133
      %p135 = pneg %p134
      // Predicated region
      $region9: #{tpu_custom_call.1} parent=5 // pred_check
        _
      $region10: #{tpu_custom_call.1} parent=5 // pred_check_branch
        %137 = sbr.rel (%p134) target = $region12
      $region11: #{tpu_custom_call.1} parent=5 // pred_region
        %s138 = ssub.s32 %s17, 1
      $region12: #{tpu_custom_call.1} parent=5 // pred_fallthru
        _
      %p139 = scmp.lt.s32.totalorder %s17, 2
      // Predicated region
      $region13: #{tpu_custom_call.1} parent=5 // pred_check
        %p140 = pneg %p139
      $region14: #{tpu_custom_call.1} parent=5 // pred_check_branch
        %142 = sbr.rel (%p140) target = $region16
      $region15: #{tpu_custom_call.1} parent=5 // pred_region
        // Predicated region
        $region17: #{tpu_custom_call.1} parent=15 // pred_check
          %p143 = pneg %p58
        $region18: #{tpu_custom_call.1} parent=15 // pred_check_branch
          %145 = sbr.rel (%p143) target = $region20
        $region19: #{tpu_custom_call.1} parent=15 // pred_region
          %s146 = sand.u32 %s48, 1
          %s147 = scalar_lea.sflag [#allocation4], %s146
          %s148 = sand.u32 %s48, 1
          %s149 = smul.addr %s148, 8
          %s150 = scalar_lea.vmem [#allocation3], %s149
          %s152 = ssub.s32 128, 128
          %153 = vsyncadd %s147, %s152
          %s154 = sadd.s32 %s25, %s24
          %s155 = smul.addr %s154, 128
          %s156 = scalar_lea.hbm %s0, %s155
          %s158 = sshll.u32 %s150, 4
          %s159 = int_to_ptr.vmem [resolvable:$true] %s158
          %161 = dma.hbm_to_vmem [thread:$0]  %s156, 128, %s159, %s147
        $region20: #{tpu_custom_call.1} parent=15 // pred_fallthru
          _
        // Predicated region
        $region21: #{tpu_custom_call.1} parent=15 // pred_check
          %p162 = pneg %p88
        $region22: #{tpu_custom_call.1} parent=15 // pred_check_branch
          %164 = sbr.rel (%p162) target = $region24
        $region23: #{tpu_custom_call.1} parent=15 // pred_region
          %s165 = sand.u32 %s78, 1
          %s166 = scalar_lea.sflag [#allocation7], %s165
          %s167 = sand.u32 %s78, 1
          %s168 = smul.addr %s167, 64
          %s169 = scalar_lea.vmem [#allocation6], %s168
          %s170 = smul.u32 8, %s25
          %s172 = ssub.s32 1024, 1024
          %173 = vsyncadd %s166, %s172
          %s174 = sadd.s32 %s26, %s170
          %s175 = smul.addr %s24, 8
          %s176 = sadd.s32 %s174, %s175
          %s177 = smul.addr %s176, 128
          %s178 = scalar_lea.hbm %s1, %s177
          %s179 = sshll.u32 %s169, 4
          %s180 = int_to_ptr.vmem [resolvable:$true] %s179
          %185 = dma.hbm_to_vmem [thread:$0]  %s178, 1024, %s180, %s166, 128, 128, 8
        $region24: #{tpu_custom_call.1} parent=15 // pred_fallthru
          _
      $region16: #{tpu_custom_call.1} parent=5 // pred_fallthru
        _
      %p186 = scmp.le.s32.totalorder 1, %s17
      %p187 = scmp.lt.s32.totalorder %s17, 3
      %p188 = pnand %p186, %p187
      %p189 = pneg %p188
      // Predicated region
      $region25: #{tpu_custom_call.1} parent=5 // pred_check
        _
      $region26: #{tpu_custom_call.1} parent=5 // pred_check_branch
        %191 = sbr.rel (%p188) target = $region28
      $region27: #{tpu_custom_call.1} parent=5 // pred_region
        %s192 = ssub.s32 %s17, 1
        %s193 = sand.u32 %s51, 1
        %s194 = scalar_lea.sflag [#allocation4], %s193
        %s195 = sand.u32 %s51, 1
        %s196 = smul.addr %s195, 8
        %s197 = scalar_lea.vmem [#allocation3], %s196
        // Predicated region
        $region29: #{tpu_custom_call.1} parent=27 // pred_check
          %p198 = pneg %p64
        $region30: #{tpu_custom_call.1} parent=27 // pred_check_branch
          %200 = sbr.rel (%p198) target = $region32
        $region31: #{tpu_custom_call.1} parent=27 // pred_region
          %201 = dma.done %s194, 128
        $region32: #{tpu_custom_call.1} parent=27 // pred_fallthru
          _
        %s202 = sand.u32 %s81, 1
        %s203 = scalar_lea.sflag [#allocation7], %s202
        %s204 = sand.u32 %s81, 1
        %s205 = smul.addr %s204, 64
        %s206 = scalar_lea.vmem [#allocation6], %s205
        // Predicated region
        $region33: #{tpu_custom_call.1} parent=27 // pred_check
          %p207 = pneg %p94
        $region34: #{tpu_custom_call.1} parent=27 // pred_check_branch
          %209 = sbr.rel (%p207) target = $region36
        $region35: #{tpu_custom_call.1} parent=27 // pred_region
          %210 = dma.done %s203, 1024
        $region36: #{tpu_custom_call.1} parent=27 // pred_fallthru
          _
        %s211 = sand.u32 %s51, 1
        %s212 = scalar_lea.sflag [#allocation4], %s211
        %s213 = sand.u32 %s51, 1
        %s214 = smul.addr %s213, 8
        %s215 = scalar_lea.vmem [#allocation3], %s214
        %p216 = pneg %p64
        %p217 = pneg %p61
        %s218 = sand.u32 %s81, 1
        %s219 = scalar_lea.sflag [#allocation7], %s218
        %s220 = sand.u32 %s81, 1
        %s221 = smul.addr %s220, 64
        %s222 = scalar_lea.vmem [#allocation6], %s221
        %p223 = pneg %p94
        %p224 = pneg %p91
        %p225 = pneg %p124
        %p226 = pneg %p121
        %s227 = sand.u32 %s111, 1
        %s228 = scalar_lea.sflag [#allocation5], %s227
        %s229 = sand.u32 %s111, 1
        %s230 = smul.addr %s229, 8
        %s231 = scalar_lea.vmem [#allocation8], %s230
        %s232 = smul.u32 8, %s28
        %p233 = scmp.eq.s32.totalorder %s29, 0
        // Predicated region
        $region37: #{tpu_custom_call.1} parent=27 // pred_check
          %p234 = pneg %p233
        $region38: #{tpu_custom_call.1} parent=27 // pred_check_branch
          %236 = sbr.rel (%p234) target = $region40
        $region39: #{tpu_custom_call.1} parent=27 // pred_region
          %v237 = vld [vmem:[%s197] sm:$0xff]
          %vm238 = vcmask 64512
          %v239 = vsel %vm238, %v237, -inf
          %240 = vmax.xlane.f32.xlu0 %v239
          %v241 = vpop.xlane.xlu0 %240
          %v242 = vsub.f32 %v237, %v241
          %v243 = vmul.f32 %v242, 1.442695
          %v244 = vpow.pop %v243
          %v245 = vsel %vm238, %v244, 0.0
          %246 = vadd.xlane.f32.xlu0 %v245
          %v247 = vpop.xlane.xlu0 %246
          %v248 = vrcp.pop %v247
          %v249 = vmul.f32 %v247, %v248
          %v250 = vsub.f32 2.0, %v249
          %v251 = vmul.f32 %v248, %v250
          %v252 = vmul.f32 %v244, %v251
          %253 = vst.msk [vmem:[#allocation2] sm:$0xff] %vm238, %v252
        $region40: #{tpu_custom_call.1} parent=27 // pred_fallthru
          _
        %v254 = vld [vmem:[%s206] sm:$0xff]
        %v255 = vld [vmem:[%s206 + $0x8] sm:$0xff]
        %v256 = vld [vmem:[%s206 + $0x10] sm:$0xff]
        %v257 = vld [vmem:[%s206 + $0x18] sm:$0xff]
        %v258 = vld [vmem:[%s206 + $0x20] sm:$0xff]
        %v259 = vld [vmem:[%s206 + $0x28] sm:$0xff]
        %v260 = vld [vmem:[%s206 + $0x30] sm:$0xff]
        %v261 = vld [vmem:[%s206 + $0x38] sm:$0xff]
        %v262 = vld [vmem:[#allocation2] sm:$0xff]
        %v263 = vlaneseq
        %v264 = vshrl.u32 %v263, 7
        %v265 = vsub.s32 0, %v264
        %v266 = vrot.slane %v262, %v265
        %268 = vbcast.lane.b32.xlu0 %v266, 256
        %v269 = vpop.permute.xlu0 %268
        %v270 = vlaneseq
        %v271 = vshrl.u32 %v270, 7
        %v272 = vsub.s32 1, %v271
        %v273 = vrot.slane %v262, %v272
        %275 = vbcast.lane.b32.xlu0 %v273, 256
        %v276 = vpop.permute.xlu0 %275
        %v277 = vlaneseq
        %v278 = vshrl.u32 %v277, 7
        %v279 = vsub.s32 2, %v278
        %v280 = vrot.slane %v262, %v279
        %282 = vbcast.lane.b32.xlu0 %v280, 256
        %v283 = vpop.permute.xlu0 %282
        %v284 = vlaneseq
        %v285 = vshrl.u32 %v284, 7
        %v286 = vsub.s32 3, %v285
        %v287 = vrot.slane %v262, %v286
        %289 = vbcast.lane.b32.xlu0 %v287, 256
        %v290 = vpop.permute.xlu0 %289
        %v291 = vlaneseq
        %v292 = vshrl.u32 %v291, 7
        %v293 = vsub.s32 4, %v292
        %v294 = vrot.slane %v262, %v293
        %296 = vbcast.lane.b32.xlu0 %v294, 256
        %v297 = vpop.permute.xlu0 %296
        %v298 = vlaneseq
        %v299 = vshrl.u32 %v298, 7
        %v300 = vsub.s32 5, %v299
        %v301 = vrot.slane %v262, %v300
        %303 = vbcast.lane.b32.xlu0 %v301, 256
        %v304 = vpop.permute.xlu0 %303
        %v305 = vlaneseq
        %v306 = vshrl.u32 %v305, 7
        %v307 = vsub.s32 6, %v306
        %v308 = vrot.slane %v262, %v307
        %310 = vbcast.lane.b32.xlu0 %v308, 256
        %v311 = vpop.permute.xlu0 %310
        %v312 = vlaneseq
        %v313 = vshrl.u32 %v312, 7
        %v314 = vsub.s32 7, %v313
        %v315 = vrot.slane %v262, %v314
        %317 = vbcast.lane.b32.xlu0 %v315, 256
        %v318 = vpop.permute.xlu0 %317
        %v319 = vmul.f32 %v254, %v269
        %v320 = vmul.f32 %v255, %v276
        %v321 = vmul.f32 %v256, %v283
        %v322 = vmul.f32 %v257, %v290
        %v323 = vmul.f32 %v258, %v297
        %v324 = vmul.f32 %v259, %v304
        %v325 = vmul.f32 %v260, %v311
        %v326 = vmul.f32 %v261, %v318
        %vm327 = vcmask 261120
        %v328 = vsel %vm327, %v319, 0.0
        %v329 = vrot.slane %v328, 4
        %v330 = vadd.f32 %v328, %v329
        %v331 = vrot.slane %v330, 2
        %v332 = vadd.f32 %v330, %v331
        %v333 = vrot.slane %v332, 1
        %v334 = vadd.f32 %v332, %v333
        %v335 = vsel %vm327, %v320, 0.0
        %v336 = vrot.slane %v335, 4
        %v337 = vadd.f32 %v335, %v336
        %v338 = vrot.slane %v337, 2
        %v339 = vadd.f32 %v337, %v338
        %v340 = vrot.slane %v339, 1
        %v341 = vadd.f32 %v339, %v340
        %v342 = vsel %vm327, %v321, 0.0
        %v343 = vrot.slane %v342, 4
        %v344 = vadd.f32 %v342, %v343
        %v345 = vrot.slane %v344, 2
        %v346 = vadd.f32 %v344, %v345
        %v347 = vrot.slane %v346, 1
        %v348 = vadd.f32 %v346, %v347
        %v349 = vsel %vm327, %v322, 0.0
        %v350 = vrot.slane %v349, 4
        %v351 = vadd.f32 %v349, %v350
        %v352 = vrot.slane %v351, 2
        %v353 = vadd.f32 %v351, %v352
        %v354 = vrot.slane %v353, 1
        %v355 = vadd.f32 %v353, %v354
        %v356 = vsel %vm327, %v323, 0.0
        %v357 = vrot.slane %v356, 4
        %v358 = vadd.f32 %v356, %v357
        %v359 = vrot.slane %v358, 2
        %v360 = vadd.f32 %v358, %v359
        %v361 = vrot.slane %v360, 1
        %v362 = vadd.f32 %v360, %v361
        %v363 = vsel %vm327, %v324, 0.0
        %v364 = vrot.slane %v363, 4
        %v365 = vadd.f32 %v363, %v364
        %v366 = vrot.slane %v365, 2
        %v367 = vadd.f32 %v365, %v366
        %v368 = vrot.slane %v367, 1
        %v369 = vadd.f32 %v367, %v368
        %v370 = vsel %vm327, %v325, 0.0
        %v371 = vrot.slane %v370, 4
        %v372 = vadd.f32 %v370, %v371
        %v373 = vrot.slane %v372, 2
        %v374 = vadd.f32 %v372, %v373
        %v375 = vrot.slane %v374, 1
        %v376 = vadd.f32 %v374, %v375
        %v377 = vsel %vm327, %v326, 0.0
        %v378 = vrot.slane %v377, 4
        %v379 = vadd.f32 %v377, %v378
        %v380 = vrot.slane %v379, 2
        %v381 = vadd.f32 %v379, %v380
        %v382 = vrot.slane %v381, 1
        %v383 = vadd.f32 %v381, %v382
        %vm392 = vcmask 1041409
        %v393 = vsel %vm392, %v341, %v334
        %vm394 = vcmask 1042434
        %v395 = vsel %vm394, %v348, %v393
        %vm396 = vcmask 1043459
        %v397 = vsel %vm396, %v355, %v395
        %vm398 = vcmask 1044484
        %v399 = vsel %vm398, %v362, %v397
        %vm400 = vcmask 1045509
        %v401 = vsel %vm400, %v369, %v399
        %vm402 = vcmask 1046534
        %v403 = vsel %vm402, %v376, %v401
        %vm404 = vcmask 1047559
        %v405 = vsel %vm404, %v383, %v403
        %407 = vst.msk [vmem:[%s231] sm:$0xff] %vm327, %v405
        %s408 = sand.u32 %s111, 1
        %s409 = scalar_lea.sflag [#allocation5], %s408
        %s410 = sand.u32 %s111, 1
        %s411 = smul.addr %s410, 8
        %s412 = scalar_lea.vmem [#allocation8], %s411
        // Predicated region
        $region41: #{tpu_custom_call.1} parent=27 // pred_check
          %p413 = pneg %p121
        $region42: #{tpu_custom_call.1} parent=27 // pred_check_branch
          %415 = sbr.rel (%p413) target = $region44
        $region43: #{tpu_custom_call.1} parent=27 // pred_region
          %s417 = ssub.s32 128, 128
          %418 = vsyncadd %s409, %s417
          %s419 = sadd.s32 %s29, %s28
          %s420 = sadd.s32 %s419, %s27
          %s421 = smul.addr %s420, 128
          %s422 = scalar_lea.hbm %s2, %s421
          %s424 = sshll.u32 %s412, 4
          %s425 = int_to_ptr.vmem [resolvable:$true] %s424
          %427 = dma.vmem_to_hbm [thread:$0]  %s425, 128, %s422, %s409
        $region44: #{tpu_custom_call.1} parent=27 // pred_fallthru
          _
      $region28: #{tpu_custom_call.1} parent=5 // pred_fallthru
        _
      %p428 = scmp.le.s32.totalorder 2, %s17
      // Predicated region
      $region45: #{tpu_custom_call.1} parent=5 // pred_check
        %p429 = pneg %p428
      $region46: #{tpu_custom_call.1} parent=5 // pred_check_branch
        %431 = sbr.rel (%p429) target = $region48
      $region47: #{tpu_custom_call.1} parent=5 // pred_region
        %s432 = ssub.s32 %s17, 2
        // Predicated region
        $region49: #{tpu_custom_call.1} parent=47 // pred_check
          %p433 = pneg %p127
        $region50: #{tpu_custom_call.1} parent=47 // pred_check_branch
          %435 = sbr.rel (%p433) target = $region52
        $region51: #{tpu_custom_call.1} parent=47 // pred_region
          %s436 = sand.u32 %s112, 1
          %s437 = scalar_lea.sflag [#allocation5], %s436
          %s438 = sand.u32 %s112, 1
          %s439 = smul.addr %s438, 8
          %s440 = scalar_lea.vmem [#allocation8], %s439
          %441 = dma.done %s437, 128
        $region52: #{tpu_custom_call.1} parent=47 // pred_fallthru
          _
      $region48: #{tpu_custom_call.1} parent=5 // pred_fallthru
        _
    $region6: #{tpu_custom_call.1} parent=1 // loop_footer
      %s21 = sadd.s32 1, %s17
    $region7: #{tpu_custom_call.1} parent=1 // loop_footer_branch
      %16 = sbr.rel target = $region3
    $region8: #{tpu_custom_call.1} parent=1 // loop_exit
      _
    %442 = vsyncpa [#allocation4], 1
    %s443 = scalar_lea.sflag [#allocation4], 1
    %444 = vsyncpa %s443, 1
    %445 = vsyncpa [#allocation7], 1
    %s446 = scalar_lea.sflag [#allocation7], 1
    %447 = vsyncpa %s446, 1
    %448 = vsyncpa [#allocation5], 1
    %s449 = scalar_lea.sflag [#allocation5], 1
    %450 = vsyncpa %s449, 1

</llo_original>
